<compile_context>
chip_gen: v7x
topology: tpu7x:2x2x1
jax: 0.10.0
libtpu: 0.0.40
codegen_flags: <defaults>
</compile_context>

<pallas_src>
import functools

import jax
import jax.numpy as jnp
from jax import lax
from jax.experimental import pallas as pl
from jax.experimental.pallas import tpu as pltpu


def _layernorm_kernel(*refs, eps: float, affine: bool):
    if affine:
        x_ref, w_ref, b_ref, o_ref = refs
    else:
        x_ref, o_ref = refs

    x = x_ref[...].astype(jnp.float32)            # (1, C, Tt)  C->sublane, Tt->lane
    c = x.shape[1]
    inv_c = 1.0 / c

    # One-pass channel statistics (reduction over sublane axis).
    s1 = jnp.sum(x, axis=1, keepdims=True)        # (1, 1, Tt)
    s2 = jnp.sum(x * x, axis=1, keepdims=True)    # (1, 1, Tt)
    mu = s1 * inv_c
    var = jnp.maximum(s2 * inv_c - mu * mu, 0.0)
    inv = lax.rsqrt(var + eps)                    # EUP rsqrt, (1, 1, Tt)

    res = x - mu
    if affine:
        w = w_ref[...].astype(jnp.float32)        # (1, C, 1) -> broadcasts over T
        b = b_ref[...].astype(jnp.float32)
        out = res * (inv * w) + b
    else:
        out = res * inv

    o_ref[...] = out.astype(o_ref.dtype)


def _round_up(n: int, m: int) -> int:
    return ((n + m - 1) // m) * m


def _choose_t_tile(C: int, T_pad: int, itemsize: int) -> int:
    # in + out blocks, double-buffered: 4 * C * T_TILE * itemsize, plus f32
    # intermediates inside the body.  Keep well under v5e's 16 MiB scoped default.
    budget_bytes = 6 * 1024 * 1024
    max_tile = max(128, (budget_bytes // (4 * C * max(itemsize, 4))) // 128 * 128)
    max_tile = min(max_tile, 1024)                # enough lanes; keep grid non-trivial
    k = T_pad // 128                              # T_pad is a multiple of 128
    g = max(1, min(k, max_tile // 128))
    while k % g != 0:                             # largest multiple of 128 dividing T_pad
        g -= 1
    return 128 * g


def layer_norm(x: jax.Array, weight=None, bias=None,
               eps: float = 1e-5, affine: bool = True) -> jax.Array:
    """Channel LayerNorm over dim=1 of x with shape (B, C, T)."""
    assert x.ndim == 3
    B, C, T = x.shape
    if affine:
        assert weight.shape == (1, C, 1) and bias.shape == (1, C, 1)

    itemsize = jnp.dtype(x.dtype).itemsize
    T_pad = _round_up(max(T, 128), 128)
    t_tile = _choose_t_tile(C, T_pad, itemsize)

    x_in = x
    if T_pad != T:
        # Zero-pad the lane axis; padded columns produce finite garbage that is sliced off.
        x_in = jnp.pad(x, ((0, 0), (0, 0), (0, T_pad - T)))

    grid = (B, T_pad // t_tile)

    x_spec = pl.BlockSpec((1, C, t_tile), lambda b, t: (b, 0, t))
    out_spec = pl.BlockSpec((1, C, t_tile), lambda b, t: (b, 0, t))

    kernel = functools.partial(_layernorm_kernel, eps=eps, affine=affine)

    if affine:
        in_specs = [
            x_spec,
            # Constant block index -> fetched once, not per grid step.
            pl.BlockSpec((1, C, 1), lambda b, t: (0, 0, 0)),
            pl.BlockSpec((1, C, 1), lambda b, t: (0, 0, 0)),
        ]
        args = (x_in, weight, bias)
    else:
        in_specs = [x_spec]
        args = (x_in,)

    out = pl.pallas_call(
        kernel,
        out_shape=jax.ShapeDtypeStruct((B, C, T_pad), x.dtype),
        grid_spec=pltpu.PrefetchScalarGridSpec(
            num_scalar_prefetch=0,
            grid=grid,
            in_specs=in_specs,
            out_specs=out_spec,
        ),
        compiler_params=pltpu.CompilerParams(
            dimension_semantics=("parallel", "parallel")),
    )(*args)

    if T_pad != T:
        out = out[:, :, :T]
    return out


def layer_norm_ref(x, weight, bias, eps=1e-5, affine=True):
    xf = x.astype(jnp.float32)
    mu = jnp.mean(xf, axis=1, keepdims=True)
    res = xf - mu
    sigma = jnp.mean(res * res, axis=1, keepdims=True)
    out = res / jnp.sqrt(sigma + eps)
    if affine:
        out = out * weight.astype(jnp.float32) + bias.astype(jnp.float32)
    return out.astype(x.dtype)


if __name__ == "__main__":
    B, C, T = 2, 4, 16
    eps = 1e-5

    key = jax.random.PRNGKey(0)
    kx, kw, kb = jax.random.split(key, 3)

    x = jax.random.normal(kx, (B, C, T), dtype=jnp.float32)
    # Module __init__ uses ones/zeros of shape (1, C, 1); perturb deterministically
    # so the affine path is actually exercised.
    weight = jnp.ones((1, C, 1), jnp.float32) + 0.1 * jax.random.normal(kw, (1, C, 1), jnp.float32)
    bias = jnp.zeros((1, C, 1), jnp.float32) + 0.1 * jax.random.normal(kb, (1, C, 1), jnp.float32)

    # affine=True path
    out = layer_norm(x, weight, bias, eps=eps, affine=True)
    out = jax.block_until_ready(out)
    ref = layer_norm_ref(x, weight, bias, eps=eps, affine=True)
    assert out.shape == x.shape and out.dtype == x.dtype
    assert jnp.allclose(out, ref, atol=1e-5, rtol=1e-5), "affine mismatch vs reference"

    # affine=False path
    out_na = layer_norm(x, eps=eps, affine=False)
    out_na = jax.block_until_ready(out_na)
    ref_na = layer_norm_ref(x, weight, bias, eps=eps, affine=False)
    assert jnp.allclose(out_na, ref_na, atol=1e-5, rtol=1e-5), "no-affine mismatch vs reference"

    print("KERNEL_OK")
</pallas_src>

<mosaic_0001>
module attributes {stable_mosaic.version = 11 : i64} {
  func.func @_layernorm_kernel(%arg0: i32, %arg1: i32, %arg2: memref<1x4x128xf32, #tpu.memory_space<vmem>>, %arg3: memref<1x4x1xf32, #tpu.memory_space<vmem>>, %arg4: memref<1x4x1xf32, #tpu.memory_space<vmem>>, %arg5: memref<1x4x128xf32, #tpu.memory_space<vmem>>) attributes {dimension_semantics = [#tpu.dimension_semantics<parallel>, #tpu.dimension_semantics<parallel>], iteration_bounds = array<i64: 2, 1>, scalar_prefetch = 0 : i64, scratch_operands = 0 : i64, tpu.core_type = #tpu.core_type<tc>, window_params = [{transform_indices = @transform_0, window_bounds = array<i64: 1, 4, 128>}, {pipeline_mode = #tpu.pipeline_mode<synchronous>, transform_indices = @transform_1, window_bounds = array<i64: 1, 4, 1>}, {pipeline_mode = #tpu.pipeline_mode<synchronous>, transform_indices = @transform_2, window_bounds = array<i64: 1, 4, 1>}, {transform_indices = @transform_3, window_bounds = array<i64: 1, 4, 128>}]} {
    %c0 = arith.constant 0 : index
    %c0_0 = arith.constant 0 : index
    %c0_1 = arith.constant 0 : index
    %0 = vector.load %arg2[%c0, %c0_0, %c0_1] : memref<1x4x128xf32, #tpu.memory_space<vmem>>, vector<1x4x128xf32>
    %cst = arith.constant dense<0.000000e+00> : vector<1x128xf32>
    %1 = vector.multi_reduction <add>, %0, %cst [1] : vector<1x4x128xf32> to vector<1x128xf32>
    %2 = vector.shape_cast %1 : vector<1x128xf32> to vector<1x1x128xf32>
    %3 = arith.mulf %0, %0 : vector<1x4x128xf32>
    %cst_2 = arith.constant dense<0.000000e+00> : vector<1x128xf32>
    %4 = vector.multi_reduction <add>, %3, %cst_2 [1] : vector<1x4x128xf32> to vector<1x128xf32>
    %5 = vector.shape_cast %4 : vector<1x128xf32> to vector<1x1x128xf32>
    %cst_3 = arith.constant 2.500000e-01 : f32
    %6 = vector.broadcast %cst_3 : f32 to vector<1x1x128xf32>
    %7 = arith.mulf %2, %6 : vector<1x1x128xf32>
    %cst_4 = arith.constant 2.500000e-01 : f32
    %8 = vector.broadcast %cst_4 : f32 to vector<1x1x128xf32>
    %9 = arith.mulf %5, %8 : vector<1x1x128xf32>
    %10 = arith.mulf %7, %7 : vector<1x1x128xf32>
    %11 = arith.subf %9, %10 : vector<1x1x128xf32>
    %cst_5 = arith.constant 0.000000e+00 : f32
    %12 = vector.broadcast %cst_5 : f32 to vector<1x1x128xf32>
    %13 = arith.maximumf %11, %12 : vector<1x1x128xf32>
    %cst_6 = arith.constant 9.99999974E-6 : f32
    %14 = vector.broadcast %cst_6 : f32 to vector<1x1x128xf32>
    %15 = arith.addf %13, %14 : vector<1x1x128xf32>
    %16 = math.rsqrt %15 : vector<1x1x128xf32>
    %17 = vector.broadcast %7 : vector<1x1x128xf32> to vector<1x4x128xf32>
    %18 = arith.subf %0, %17 : vector<1x4x128xf32>
    %c0_7 = arith.constant 0 : index
    %c0_8 = arith.constant 0 : index
    %c0_9 = arith.constant 0 : index
    %19 = vector.load %arg3[%c0_7, %c0_8, %c0_9] : memref<1x4x1xf32, #tpu.memory_space<vmem>>, vector<1x4x1xf32>
    %c0_10 = arith.constant 0 : index
    %c0_11 = arith.constant 0 : index
    %c0_12 = arith.constant 0 : index
    %20 = vector.load %arg4[%c0_10, %c0_11, %c0_12] : memref<1x4x1xf32, #tpu.memory_space<vmem>>, vector<1x4x1xf32>
    %21 = vector.broadcast %16 : vector<1x1x128xf32> to vector<1x4x128xf32>
    %22 = vector.broadcast %19 : vector<1x4x1xf32> to vector<1x4x128xf32>
    %23 = arith.mulf %21, %22 : vector<1x4x128xf32>
    %24 = arith.mulf %18, %23 : vector<1x4x128xf32>
    %25 = vector.broadcast %20 : vector<1x4x1xf32> to vector<1x4x128xf32>
    %26 = arith.addf %24, %25 : vector<1x4x128xf32>
    %c0_13 = arith.constant 0 : index
    %c0_14 = arith.constant 0 : index
    %c0_15 = arith.constant 0 : index
    %27 = vector.load %arg5[%c0_13, %c0_14, %c0_15] : memref<1x4x128xf32, #tpu.memory_space<vmem>>, vector<1x4x128xf32>
    tpu.vector_store %arg5[%c0_13, %c0_14, %c0_15], %26 {strides = array<i32>} : memref<1x4x128xf32, #tpu.memory_space<vmem>>, vector<1x4x128xf32>,
    return
  }
  func.func @transform_0(%arg0: i32, %arg1: i32) -> (i32, i32, i32) {
    %c0_i32 = arith.constant 0 : i32
    %c0_i32_0 = arith.constant 0 : i32
    return %arg0, %c0_i32, %arg1 : i32, i32, i32
  }
  func.func @transform_1(%arg0: i32, %arg1: i32) -> (i32, i32, i32) {
    %c0_i32 = arith.constant 0 : i32
    %c0_i32_0 = arith.constant 0 : i32
    %c0_i32_1 = arith.constant 0 : i32
    %c0_i32_2 = arith.constant 0 : i32
    return %c0_i32, %c0_i32_0, %c0_i32_1 : i32, i32, i32
  }
  func.func @transform_2(%arg0: i32, %arg1: i32) -> (i32, i32, i32) {
    %c0_i32 = arith.constant 0 : i32
    %c0_i32_0 = arith.constant 0 : i32
    %c0_i32_1 = arith.constant 0 : i32
    %c0_i32_2 = arith.constant 0 : i32
    return %c0_i32, %c0_i32_0, %c0_i32_1 : i32, i32, i32
  }
  func.func @transform_3(%arg0: i32, %arg1: i32) -> (i32, i32, i32) {
    %c0_i32 = arith.constant 0 : i32
    %c0_i32_0 = arith.constant 0 : i32
    return %arg0, %c0_i32, %arg1 : i32, i32, i32
  }
}

</mosaic_0001>

<llo_original>
// kernel: tpu_custom_call.1
$region0: #{tpu_custom_call.1}
  #allocation0 [shape = 'u32[]', space=smem, size = 0x4, offset = 0x4, fixed_abs, tag = 'smem constant byte address 0x4 - core index']
  #allocation1 [shape = 'u32[144,128]{1,0:T(1,128)}', space=vmem, size = 0x12000, scoped, tag = 'internal scratch']
  %s0 = inlined_call_operand.vmem [shape: f32[2,4,128], index: 0, kind: input, shape index: {}]
  %s1 = inlined_call_operand.vmem [shape: f32[1,4,1], index: 1, kind: input, shape index: {}]
  %s2 = inlined_call_operand.vmem [shape: f32[1,4,1], index: 2, kind: input, shape index: {}]
  %s3 = inlined_call_operand.hbm [shape: f32[2,4,128], index: 3, kind: output, shape index: {}]
  %s4 = sld [smem:[#allocation0]]
  $region45: #{tpu_custom_call.1} parent=0
    _
  %s6 = ssub.s32 1, %s4
  %s7 = scalar_select 0, %s6, %s4
  $region1: #{tpu_custom_call.1} parent=0
    #allocation2 [shape = 'u8[4096]{0}', space=vmem, size = 0x1000, scoped, tag = 'output window, operand 0']
    #allocation3 [shape = 's32[2]{0}', space=sflag, size = 0x8, scoped, tag = 'scoped memory for tpu_custom_call.1']
    %8 = vsyncpa [#allocation3], 0
    %s9 = scalar_lea.sflag [#allocation3], 1
    %10 = vsyncpa %s9, 0
    loop: start=0, step=1, limit=4
    $region2: #{tpu_custom_call.1} parent=1 // loop_pre_header
      _
    $region3: #{tpu_custom_call.1} parent=1 // loop_header
      %s12 = sphi 0, %s16
      %p13 = scmp.ge.s32.totalorder %s12, 4
      %s19 = sphi 0, %s31
      %s20 = sphi 0, %s27
      %s21 = sphi 0, %s19
      %s22 = sphi 0, %s20
      %s23 = sphi 0, %s21
      %s24 = sphi 0, %s22
      %s36 = sphi 0, %s38
      %s39 = sphi 0, %s36
      %s40 = sphi 0, %s39
      %s56 = sphi 0, %s40
      %s60 = sphi 0, %s60
      %s62 = sphi 0, %s60
      %s63 = sphi 0, %s62
      %s77 = sphi 0, %s63
      %s81 = sphi 0, %s81
      %s83 = sphi 0, %s81
      %s84 = sphi 0, %s83
      %s98 = sphi 0, %s84
      %s106 = sphi 0, %s108
      %s109 = sphi 0, %s106
      %s110 = sphi 0, %s109
      %s126 = sphi 0, %s110
    $region4: #{tpu_custom_call.1} parent=1 // loop_header_branch
      %15 = sbr.rel (%p13) target = $region8
    $region5: #{tpu_custom_call.1} parent=1 // loop_body
      %s17 = ssub.s32 %s12, 1
      %s18 = ssub.s32 %s12, 2
      %s25 = sadd.s32 1, %s20
      %p26 = scmp.ge.s32.totalorder %s25, 1
      %s27 = scalar_select %p26, 0, %s25
      %s28 = sadd.s32 1, %s19
      %s29 = scalar_select %p26, %s28, %s19
      %p30 = scmp.ge.s32.totalorder %s29, 2
      %s31 = scalar_select %p30, 0, %s29
      %s32 = ssub.s32 %s19, %s31
      %s33 = ssub.s32 %s20, %s27
      %s34 = sor.u32 %s32, %s33
      %p35 = scmp.eq.s32.totalorder %s34, 0
      %s37 = sadd.s32 %s36, 1
      %s38 = scalar_select %p35, %s36, %s37
      %p41 = pneg %p35
      %p42 = scmp.eq.s32.totalorder %s12, 1
      %p43 = por %p41, %p42
      %p44 = scmp.ne.s32.totalorder %s36, %s39
      %p45 = scmp.eq.s32.totalorder %s12, 0
      %p46 = por %p44, %p45
      %p47 = scmp.ne.s32.totalorder %s36, %s39
      %p48 = scmp.eq.s32.totalorder %s17, 1
      %p49 = por %p47, %p48
      %p50 = scmp.ne.s32.totalorder %s39, %s40
      %p51 = scmp.eq.s32.totalorder %s17, 0
      %p52 = por %p50, %p51
      %p53 = scmp.ne.s32.totalorder %s39, %s40
      %p54 = scmp.eq.s32.totalorder %s18, 1
      %p55 = por %p53, %p54
      %p57 = scmp.ne.s32.totalorder %s40, %s56
      %p58 = scmp.eq.s32.totalorder %s18, 0
      %p59 = por %p57, %p58
      %s61 = sadd.s32 %s60, 1
      %p64 = scmp.eq.s32.totalorder %s12, 1
      %p65 = scmp.ne.s32.totalorder %s60, %s62
      %p66 = scmp.eq.s32.totalorder %s12, 0
      %p67 = por %p65, %p66
      %p68 = scmp.ne.s32.totalorder %s60, %s62
      %p69 = scmp.eq.s32.totalorder %s17, 1
      %p70 = por %p68, %p69
      %p71 = scmp.ne.s32.totalorder %s62, %s63
      %p72 = scmp.eq.s32.totalorder %s17, 0
      %p73 = por %p71, %p72
      %p74 = scmp.ne.s32.totalorder %s62, %s63
      %p75 = scmp.eq.s32.totalorder %s18, 1
      %p76 = por %p74, %p75
      %p78 = scmp.ne.s32.totalorder %s63, %s77
      %p79 = scmp.eq.s32.totalorder %s18, 0
      %p80 = por %p78, %p79
      %s82 = sadd.s32 %s81, 1
      %p85 = scmp.eq.s32.totalorder %s12, 1
      %p86 = scmp.ne.s32.totalorder %s81, %s83
      %p87 = scmp.eq.s32.totalorder %s12, 0
      %p88 = por %p86, %p87
      %p89 = scmp.ne.s32.totalorder %s81, %s83
      %p90 = scmp.eq.s32.totalorder %s17, 1
      %p91 = por %p89, %p90
      %p92 = scmp.ne.s32.totalorder %s83, %s84
      %p93 = scmp.eq.s32.totalorder %s17, 0
      %p94 = por %p92, %p93
      %p95 = scmp.ne.s32.totalorder %s83, %s84
      %p96 = scmp.eq.s32.totalorder %s18, 1
      %p97 = por %p95, %p96
      %p99 = scmp.ne.s32.totalorder %s84, %s98
      %p100 = scmp.eq.s32.totalorder %s18, 0
      %p101 = por %p99, %p100
      %s102 = ssub.s32 %s19, %s31
      %s103 = ssub.s32 %s20, %s27
      %s104 = sor.u32 %s102, %s103
      %p105 = scmp.eq.s32.totalorder %s104, 0
      %s107 = sadd.s32 %s106, 1
      %s108 = scalar_select %p105, %s106, %s107
      %p111 = pneg %p105
      %p112 = scmp.eq.s32.totalorder %s12, 1
      %p113 = por %p111, %p112
      %p114 = scmp.ne.s32.totalorder %s106, %s109
      %p115 = scmp.eq.s32.totalorder %s12, 0
      %p116 = por %p114, %p115
      %p117 = scmp.ne.s32.totalorder %s106, %s109
      %p118 = scmp.eq.s32.totalorder %s17, 1
      %p119 = por %p117, %p118
      %p120 = scmp.ne.s32.totalorder %s109, %s110
      %p121 = scmp.eq.s32.totalorder %s17, 0
      %p122 = por %p120, %p121
      %p123 = scmp.ne.s32.totalorder %s109, %s110
      %p124 = scmp.eq.s32.totalorder %s18, 1
      %p125 = por %p123, %p124
      %p127 = scmp.ne.s32.totalorder %s110, %s126
      %p128 = scmp.eq.s32.totalorder %s18, 0
      %p129 = por %p127, %p128
      %p130 = scmp.le.s32.totalorder 1, %s12
      %p131 = scmp.lt.s32.totalorder %s12, 3
      %p132 = pnand %p130, %p131
      %p133 = pneg %p132
      // Predicated region
      $region9: #{tpu_custom_call.1} parent=5 // pred_check
        _
      $region10: #{tpu_custom_call.1} parent=5 // pred_check_branch
        %135 = sbr.rel (%p132) target = $region12
      $region11: #{tpu_custom_call.1} parent=5 // pred_region
        %s136 = ssub.s32 %s12, 1
        // Predicated region
        $region13: #{tpu_custom_call.1} parent=11 // pred_check
          %p137 = pneg %p73
        $region14: #{tpu_custom_call.1} parent=11 // pred_check_branch
          %139 = sbr.rel (%p137) target = $region16
        $region15: #{tpu_custom_call.1} parent=11 // pred_region
          _
        $region16: #{tpu_custom_call.1} parent=11 // pred_fallthru
          _
        // Predicated region
        $region17: #{tpu_custom_call.1} parent=11 // pred_check
          %p140 = pneg %p94
        $region18: #{tpu_custom_call.1} parent=11 // pred_check_branch
          %142 = sbr.rel (%p140) target = $region20
        $region19: #{tpu_custom_call.1} parent=11 // pred_region
          _
        $region20: #{tpu_custom_call.1} parent=11 // pred_fallthru
          _
      $region12: #{tpu_custom_call.1} parent=5 // pred_fallthru
        _
      %p143 = scmp.lt.s32.totalorder %s12, 2
      // Predicated region
      $region21: #{tpu_custom_call.1} parent=5 // pred_check
        %p144 = pneg %p143
      $region22: #{tpu_custom_call.1} parent=5 // pred_check_branch
        %146 = sbr.rel (%p144) target = $region24
      $region23: #{tpu_custom_call.1} parent=5 // pred_region
        // Predicated region
        $region25: #{tpu_custom_call.1} parent=23 // pred_check
          %p147 = pneg %p46
        $region26: #{tpu_custom_call.1} parent=23 // pred_check_branch
          %149 = sbr.rel (%p147) target = $region28
        $region27: #{tpu_custom_call.1} parent=23 // pred_region
          %p150 = scmp.lt.s32.totalorder %s19, 1
          %s151 = scalar_select %p150, %s19, 1
          %p152 = scmp.lt.s32.totalorder %s20, 0
          %s153 = scalar_select %p152, %s20, 0
          %s154 = sadd.s32 %s153, %s151
          %s155 = smul.addr %s154, 4
          %s156 = scalar_lea.vmem %s0, %s155
        $region28: #{tpu_custom_call.1} parent=23 // pred_fallthru
          _
      $region24: #{tpu_custom_call.1} parent=5 // pred_fallthru
        _
      %p157 = scmp.le.s32.totalorder 1, %s12
      %p158 = scmp.lt.s32.totalorder %s12, 3
      %p159 = pnand %p157, %p158
      %p160 = pneg %p159
      // Predicated region
      $region29: #{tpu_custom_call.1} parent=5 // pred_check
        _
      $region30: #{tpu_custom_call.1} parent=5 // pred_check_branch
        %162 = sbr.rel (%p159) target = $region32
      $region31: #{tpu_custom_call.1} parent=5 // pred_region
        %s163 = ssub.s32 %s12, 1
        %p164 = scmp.lt.s32.totalorder %s21, 1
        %s165 = scalar_select %p164, %s21, 1
        %p166 = scmp.lt.s32.totalorder %s22, 0
        %s167 = scalar_select %p166, %s22, 0
        %s168 = sadd.s32 %s167, %s165
        %s169 = smul.addr %s168, 4
        %s170 = scalar_lea.vmem %s0, %s169
        %p171 = pneg %p52
        %p172 = pneg %p49
        %p173 = pneg %p73
        %p174 = pneg %p70
        %p175 = pneg %p94
        %p176 = pneg %p91
        %p177 = pneg %p122
        %p178 = pneg %p119
        %s179 = sand.u32 %s109, 1
        %s180 = scalar_lea.sflag [#allocation3], %s179
        %s181 = sand.u32 %s109, 1
        %s182 = smul.addr %s181, 4
        %s183 = scalar_lea.vmem [#allocation2], %s182
        %p184 = scmp.lt.s32.totalorder %s21, 1
        %s185 = scalar_select %p184, %s21, 1
        %p186 = scmp.lt.s32.totalorder %s22, 0
        %s187 = scalar_select %p186, %s22, 0
        %s188 = sadd.s32 %s187, %s185
        %s189 = smul.addr %s188, 4
        %s190 = scalar_lea.vmem %s0, %s189
        %v191 = vld [vmem:[%s190] sm:$0xf]
        %vm192 = vcmask 1043456
        %v193 = vsel %vm192, %v191, 0.0
        %v194 = vrot.slane %v193, 4
        %v195 = vadd.f32 %v193, %v194
        %v196 = vrot.slane %v195, 2
        %v197 = vadd.f32 %v195, %v196
        %v198 = vrot.slane %v197, 1
        %v199 = vadd.f32 %v197, %v198
        %v200 = vmul.f32 %v191, %v191
        %v201 = vsel %vm192, %v200, 0.0
        %v202 = vrot.slane %v201, 4
        %v203 = vadd.f32 %v201, %v202
        %v204 = vrot.slane %v203, 2
        %v205 = vadd.f32 %v203, %v204
        %v206 = vrot.slane %v205, 1
        %v207 = vadd.f32 %v205, %v206
        %v208 = vmul.f32 %v199, 0.25
        %v209 = vmul.f32 %v207, 0.25
        %v210 = vmul.f32 %v208, %v208
        %v211 = vsub.f32 %v209, %v210
        %v212 = vmax.f32 %v211, 0.0
        %v213 = vadd.f32 %v212, 1e-05
        %v214 = vrsqrt.pop %v213
        %v215 = vsub.f32 %v191, %v208
        %v216 = vld [vmem:[%s1] sm:$0xf]
        %v217 = vld [vmem:[%s2] sm:$0xf]
        %219 = vset.pattern.permute.xlu0 0
        %220 = vperm.xlu0 %219, %v216
        %v221 = vpop.permute.xlu0 %220
        %v223 = vmul.f32 %v214, %v221
        %v224 = vmul.f32 %v215, %v223
        %226 = vset.pattern.permute.xlu0 0
        %227 = vperm.xlu0 %226, %v217
        %v228 = vpop.permute.xlu0 %227
        %v230 = vadd.f32 %v224, %v228
        %231 = vst [vmem:[%s183] sm:$0xf] %v230
        %s232 = sand.u32 %s109, 1
        %s233 = scalar_lea.sflag [#allocation3], %s232
        %s234 = sand.u32 %s109, 1
        %s235 = smul.addr %s234, 4
        %s236 = scalar_lea.vmem [#allocation2], %s235
        // Predicated region
        $region33: #{tpu_custom_call.1} parent=31 // pred_check
          %p237 = pneg %p119
        $region34: #{tpu_custom_call.1} parent=31 // pred_check_branch
          %239 = sbr.rel (%p237) target = $region36
        $region35: #{tpu_custom_call.1} parent=31 // pred_region
          %s241 = ssub.s32 64, 64
          %242 = vsyncadd %s233, %s241
          %s243 = sadd.s32 %s22, %s21
          %s244 = smul.addr %s243, 64
          %s245 = scalar_lea.hbm %s3, %s244
          %s247 = sshll.u32 %s236, 4
          %s248 = int_to_ptr.vmem [resolvable:$true] %s247
          %250 = dma.vmem_to_hbm [thread:$0]  %s248, 64, %s245, %s233
        $region36: #{tpu_custom_call.1} parent=31 // pred_fallthru
          _
      $region32: #{tpu_custom_call.1} parent=5 // pred_fallthru
        _
      %p251 = scmp.le.s32.totalorder 2, %s12
      // Predicated region
      $region37: #{tpu_custom_call.1} parent=5 // pred_check
        %p252 = pneg %p251
      $region38: #{tpu_custom_call.1} parent=5 // pred_check_branch
        %254 = sbr.rel (%p252) target = $region40
      $region39: #{tpu_custom_call.1} parent=5 // pred_region
        %s255 = ssub.s32 %s12, 2
        // Predicated region
        $region41: #{tpu_custom_call.1} parent=39 // pred_check
          %p256 = pneg %p125
        $region42: #{tpu_custom_call.1} parent=39 // pred_check_branch
          %258 = sbr.rel (%p256) target = $region44
        $region43: #{tpu_custom_call.1} parent=39 // pred_region
          %s259 = sand.u32 %s110, 1
          %s260 = scalar_lea.sflag [#allocation3], %s259
          %s261 = sand.u32 %s110, 1
          %s262 = smul.addr %s261, 4
          %s263 = scalar_lea.vmem [#allocation2], %s262
          %264 = dma.done %s260, 64
        $region44: #{tpu_custom_call.1} parent=39 // pred_fallthru
          _
      $region40: #{tpu_custom_call.1} parent=5 // pred_fallthru
        _
    $region6: #{tpu_custom_call.1} parent=1 // loop_footer
      %s16 = sadd.s32 1, %s12
    $region7: #{tpu_custom_call.1} parent=1 // loop_footer_branch
      %11 = sbr.rel target = $region3
    $region8: #{tpu_custom_call.1} parent=1 // loop_exit
      _
    %265 = vsyncpa [#allocation3], 1
    %s266 = scalar_lea.sflag [#allocation3], 1
    %267 = vsyncpa %s266, 1

</llo_original>
